<compile_context>
chip_gen: v7x
topology: tpu7x:2x2x1
jax: 0.10.0
libtpu: 0.0.40
codegen_flags: <defaults>
</compile_context>

<pallas_src>
import functools

import jax
import jax.numpy as jnp
from jax.experimental import pallas as pl
from jax.experimental.pallas import tpu as pltpu


def _round_up(a: int, b: int) -> int:
    return (a + b - 1) // b * b


def _w8a16_kernel(x_ref, w_ref, s_ref, *rest, has_bias: bool, multi_k: bool):
    # x_ref : (tm, tk)  activation tile (bf16/f16/f32)
    # w_ref : (tk, tn)  int8 weight tile, pre-transposed (in, out) layout
    # s_ref : (1, tn)   f32 per-output-channel scales
    # rest  : [b_ref (1, tn)], o_ref (tm, tn) [, acc_ref (tm, tn) f32 scratch]
    if has_bias:
        b_ref = rest[0]
        rest = rest[1:]
    else:
        b_ref = None
    if multi_k:
        o_ref, acc_ref = rest
    else:
        (o_ref,) = rest
        acc_ref = None

    x = x_ref[...]
    w = w_ref[...].astype(x.dtype)                 # dequant: int8 -> activation dtype
    part = jnp.dot(x, w, preferred_element_type=jnp.float32)   # plain NN matmul on MXU

    def _epilogue(acc_f32):
        out = acc_f32 * s_ref[...].astype(jnp.float32)
        if has_bias:
            out = out + b_ref[...].astype(jnp.float32)
        o_ref[...] = out.astype(o_ref.dtype)

    if multi_k:
        k = pl.program_id(2)

        @pl.when(k == 0)
        def _():
            acc_ref[...] = part

        @pl.when(k != 0)
        def _():
            acc_ref[...] += part

        @pl.when(k == pl.num_programs(2) - 1)
        def _():
            _epilogue(acc_ref[...])
    else:
        _epilogue(part)


def prepare_w8a16_params(int8_weights, scales, bias=None, *,
                         tn: int = 512, tk: int = 2048,
                         full_k_threshold: int = 4096):
    """One-time weight relayout + padding. Call at model load, NOT per forward."""
    out_features, in_features = int8_weights.shape

    tn_ = min(tn, _round_up(out_features, 128))
    kp128 = _round_up(in_features, 128)
    tk_ = kp128 if kp128 <= full_k_threshold else tk   # full-K tile when it fits

    np_ = _round_up(out_features, tn_)
    kp_ = _round_up(in_features, tk_)

    # (out, in) -> (in, out): kernel then runs an NN matmul (one-time relayout cost).
    w_t = jnp.transpose(int8_weights)
    if (kp_, np_) != (in_features, out_features):
        w_t = jnp.pad(w_t, ((0, kp_ - in_features), (0, np_ - out_features)))

    s2d = jnp.reshape(scales, (1, out_features)).astype(jnp.float32)
    if np_ != out_features:
        s2d = jnp.pad(s2d, ((0, 0), (0, np_ - out_features)))

    b2d = None
    if bias is not None:
        b2d = jnp.reshape(bias, (1, out_features)).astype(jnp.float32)
        if np_ != out_features:
            b2d = jnp.pad(b2d, ((0, 0), (0, np_ - out_features)))

    return dict(w_t=w_t, scales=s2d, bias=b2d,
                scales_dtype=scales.dtype,
                N=out_features, K=in_features,
                Np=np_, Kp=kp_, tn=tn_, tk=tk_)


def w8a16_linear(x, params, *, tm: int = 512, out_dtype=None):
    """Forward: F.linear(x, int8_w.to(x.dtype)) * scales (+ bias)."""
    N, K = params["N"], params["K"]
    Np, Kp = params["Np"], params["Kp"]
    tn_, tk_ = params["tn"], params["tk"]
    has_bias = params["bias"] is not None

    assert x.shape[-1] == K
    lead = x.shape[:-1]
    x2d = x.reshape(-1, K)
    B = x2d.shape[0]

    if out_dtype is None:
        out_dtype = jnp.promote_types(x2d.dtype, params["scales_dtype"])
    x_bytes = jnp.dtype(x2d.dtype).itemsize
    out_bytes = jnp.dtype(out_dtype).itemsize

    m_align = 16 if x_bytes == 2 else 8            # bf16 sublane packing
    tm_ = min(tm, _round_up(B, m_align))
    Bp = _round_up(B, tm_)

    # Per-call padding: activations only (weights/scales/bias were pre-padded once).
    if (Bp, Kp) != (B, K):
        x2d = jnp.pad(x2d, ((0, Bp - B), (0, Kp - K)))

    grid_m = Bp // tm_
    grid_k = Kp // tk_
    tn_eff = tn_
    grid_n = Np // tn_eff
    if grid_m == 1:
        # Decode / small-M: expose >= 2 parallel blocks for v7x's two TensorCores.
        while grid_n < 2 and tn_eff > 128 and (tn_eff // 2) % 128 == 0:
            tn_eff //= 2
            grid_n = Np // tn_eff

    multi_k = grid_k > 1
    grid = (grid_m, grid_n, grid_k)

    w_spec_kwargs = {}
    if multi_k and grid_m == 1:
        # Weight-DMA-bound regime: deepen the int8 weight pipeline.
        w_spec_kwargs["pipeline_mode"] = pl.Buffered(3)

    in_specs = [
        pl.BlockSpec((tm_, tk_), lambda i, j, k: (i, k)),                      # activations
        pl.BlockSpec((tk_, tn_eff), lambda i, j, k: (k, j), **w_spec_kwargs),  # int8 W^T
        pl.BlockSpec((1, tn_eff), lambda i, j, k: (0, j)),                     # scales
    ]
    args = [x2d, params["w_t"], params["scales"]]
    if has_bias:
        in_specs.append(pl.BlockSpec((1, tn_eff), lambda i, j, k: (0, j)))
        args.append(params["bias"])

    scratch_shapes = [pltpu.VMEM((tm_, tn_eff), jnp.float32)] if multi_k else []

    # Explicit VMEM budget (v5e scoped default is 16 MiB; v7x physical is 64 MiB/TC).
    n_wbuf = 3 if (multi_k and grid_m == 1) else 2
    est_vmem = (2 * tm_ * tk_ * x_bytes                 # activation double-buffer
                + n_wbuf * tk_ * tn_eff                 # int8 weight pipeline
                + (tm_ * tn_eff * 4 if multi_k else 0)  # f32 accumulator scratch
                + 2 * tm_ * tn_eff * out_bytes          # output double-buffer
                + 8 * tn_eff * 4)                       # scales / bias
    vmem_limit = int(min(max(est_vmem + (4 << 20), 32 << 20), 56 << 20))

    cost = pl.CostEstimate(
        flops=2 * Bp * Np * Kp,
        transcendentals=0,
        bytes_accessed=(grid_n * Bp * Kp * x_bytes     # activations re-read per N tile
                        + grid_m * Kp * Np             # int8 weights re-read per M tile
                        + Bp * Np * out_bytes))        # output writeback

    kernel = functools.partial(_w8a16_kernel, has_bias=has_bias, multi_k=multi_k)

    out = pl.pallas_call(
        kernel,
        out_shape=jax.ShapeDtypeStruct((Bp, Np), out_dtype),
        grid_spec=pltpu.PrefetchScalarGridSpec(
            num_scalar_prefetch=0,
            grid=grid,
            in_specs=in_specs,
            out_specs=pl.BlockSpec((tm_, tn_eff), lambda i, j, k: (i, j)),
            scratch_shapes=scratch_shapes,
        ),
        compiler_params=pltpu.CompilerParams(
            dimension_semantics=("parallel", "parallel", "arbitrary"),
            vmem_limit_bytes=vmem_limit),
        cost_estimate=cost,
    )(*args)

    out = out[:B, :N]
    return out.reshape(*lead, N)


if __name__ == "__main__":
    # Module config from the spec: Linear(in_features=32, out_features=64), bias=True.
    in_features = 32
    out_features = 64
    batch = 2
    seq = 8

    key = jax.random.PRNGKey(0)
    k_w, k_s, k_b, k_x, k_w2, k_s2, k_b2, k_x2 = jax.random.split(key, 8)

    int8_weights = jax.random.randint(
        k_w, (out_features, in_features), -128, 127, dtype=jnp.int8)
    scales = jax.random.normal(k_s, (out_features,), dtype=jnp.float32)
    bias = jax.random.normal(k_b, (1, out_features), dtype=jnp.float32)

    # One-time relayout (model "load"); the forward calls below only pad activations.
    params_bias = prepare_w8a16_params(int8_weights, scales, bias)
    params_nobias = prepare_w8a16_params(int8_weights, scales, None)

    # 1) Canonical W8A16 path: bf16 activations, bias, single-K-step fast path.
    x_bf16 = jax.random.normal(k_x, (batch, seq, in_features), dtype=jnp.bfloat16)
    out = jax.block_until_ready(w8a16_linear(x_bf16, params_bias))

    w_deq = int8_weights.astype(x_bf16.dtype)
    ref = jnp.dot(x_bf16.reshape(-1, in_features), w_deq.T,
                  preferred_element_type=jnp.float32)
    ref = ref.reshape(batch, seq, out_features) * scales + bias
    assert out.shape == (batch, seq, out_features)
    assert out.dtype == jnp.float32
    assert jnp.allclose(out, ref, atol=1e-2, rtol=1e-2), "bf16 bias path mismatch"

    # 2) f32 activations, no bias (matches PyTorch with f32 inputs).
    x_f32 = x_bf16.astype(jnp.float32)
    out32 = jax.block_until_ready(w8a16_linear(x_f32, params_nobias))
    ref32 = (x_f32 @ int8_weights.T.astype(jnp.float32)) * scales
    assert jnp.allclose(out32, ref32, atol=1e-3, rtol=1e-3), "f32 path mismatch"

    # 3) Multi-K-step accumulator path (forced small tk) + decode-shaped M tile:
    #    exercises f32 VMEM accumulator, N-split for dual-TC, Buffered(3) weight pipe.
    in2, out2 = 256, 256
    w2 = jax.random.randint(k_w2, (out2, in2), -128, 127, dtype=jnp.int8)
    s2 = jax.random.normal(k_s2, (out2,), dtype=jnp.float32)
    b2 = jax.random.normal(k_b2, (1, out2), dtype=jnp.float32)
    params2 = prepare_w8a16_params(w2, s2, b2, tk=128, full_k_threshold=0)

    x2 = jax.random.normal(k_x2, (4, 4, in2), dtype=jnp.bfloat16)
    out2_res = jax.block_until_ready(w8a16_linear(x2, params2))
    ref2 = jnp.dot(x2.reshape(-1, in2), w2.T.astype(x2.dtype),
                   preferred_element_type=jnp.float32)
    ref2 = ref2.reshape(4, 4, out2) * s2 + b2
    assert out2_res.shape == (4, 4, out2)
    assert jnp.allclose(out2_res, ref2, atol=1.0, rtol=2e-2), "multi-K path mismatch"

    print("KERNEL_OK")
</pallas_src>

<mosaic_0001>
module attributes {stable_mosaic.version = 11 : i64} {
  func.func @_w8a16_kernel(%arg0: i32, %arg1: i32, %arg2: i32, %arg3: memref<16x128xbf16, #tpu.memory_space<vmem>>, %arg4: memref<128x128xi8, #tpu.memory_space<vmem>>, %arg5: memref<1x128xf32, #tpu.memory_space<vmem>>, %arg6: memref<1x128xf32, #tpu.memory_space<vmem>>, %arg7: memref<16x128xf32, #tpu.memory_space<vmem>>) attributes {dimension_semantics = [#tpu.dimension_semantics<parallel>, #tpu.dimension_semantics<parallel>, #tpu.dimension_semantics<arbitrary>], iteration_bounds = array<i64: 1, 1, 1>, scalar_prefetch = 0 : i64, scratch_operands = 0 : i64, tpu.core_type = #tpu.core_type<tc>, window_params = [{transform_indices = @transform_0, window_bounds = array<i64: 16, 128>}, {transform_indices = @transform_1, window_bounds = array<i64: 128, 128>}, {transform_indices = @transform_2, window_bounds = array<i64: 1, 128>}, {transform_indices = @transform_3, window_bounds = array<i64: 1, 128>}, {transform_indices = @transform_4, window_bounds = array<i64: 16, 128>}]} {
    %c0 = arith.constant 0 : index
    %c0_0 = arith.constant 0 : index
    %0 = vector.load %arg3[%c0, %c0_0] : memref<16x128xbf16, #tpu.memory_space<vmem>>, vector<16x128xbf16>
    %c0_1 = arith.constant 0 : index
    %c0_2 = arith.constant 0 : index
    %1 = vector.load %arg4[%c0_1, %c0_2] : memref<128x128xi8, #tpu.memory_space<vmem>>, vector<128x128xi8>
    %2 = arith.sitofp %1 : vector<128x128xi8> to vector<128x128xbf16>
    %cst = arith.constant dense<0.000000e+00> : vector<16x128xf32>
    %3 = tpu.matmul %0, %2, %cst {dimension_numbers = #tpu.dot_dimension_numbers<[1], [0], [0], [1], [0, 0, 1, 1], [], []>} : vector<16x128xbf16>, vector<128x128xbf16>, vector<16x128xf32> -> vector<16x128xf32>
    %c0_3 = arith.constant 0 : index
    %c0_4 = arith.constant 0 : index
    %4 = vector.load %arg5[%c0_3, %c0_4] : memref<1x128xf32, #tpu.memory_space<vmem>>, vector<1x128xf32>
    %5 = vector.broadcast %4 : vector<1x128xf32> to vector<16x128xf32>
    %6 = arith.mulf %3, %5 : vector<16x128xf32>
    %c0_5 = arith.constant 0 : index
    %c0_6 = arith.constant 0 : index
    %7 = vector.load %arg6[%c0_5, %c0_6] : memref<1x128xf32, #tpu.memory_space<vmem>>, vector<1x128xf32>
    %8 = vector.broadcast %7 : vector<1x128xf32> to vector<16x128xf32>
    %9 = arith.addf %6, %8 : vector<16x128xf32>
    %c0_7 = arith.constant 0 : index
    %c0_8 = arith.constant 0 : index
    %10 = vector.load %arg7[%c0_7, %c0_8] : memref<16x128xf32, #tpu.memory_space<vmem>>, vector<16x128xf32>
    tpu.vector_store %arg7[%c0_7, %c0_8], %9 {strides = array<i32>} : memref<16x128xf32, #tpu.memory_space<vmem>>, vector<16x128xf32>,
    return
  }
  func.func @transform_0(%arg0: i32, %arg1: i32, %arg2: i32) -> (i32, i32) {
    %c0_i32 = arith.constant 0 : i32
    return %arg0, %arg2 : i32, i32
  }
  func.func @transform_1(%arg0: i32, %arg1: i32, %arg2: i32) -> (i32, i32) {
    %c0_i32 = arith.constant 0 : i32
    return %arg2, %arg1 : i32, i32
  }
  func.func @transform_2(%arg0: i32, %arg1: i32, %arg2: i32) -> (i32, i32) {
    %c0_i32 = arith.constant 0 : i32
    %c0_i32_0 = arith.constant 0 : i32
    return %c0_i32, %arg1 : i32, i32
  }
  func.func @transform_3(%arg0: i32, %arg1: i32, %arg2: i32) -> (i32, i32) {
    %c0_i32 = arith.constant 0 : i32
    %c0_i32_0 = arith.constant 0 : i32
    return %c0_i32, %arg1 : i32, i32
  }
  func.func @transform_4(%arg0: i32, %arg1: i32, %arg2: i32) -> (i32, i32) {
    %c0_i32 = arith.constant 0 : i32
    return %arg0, %arg1 : i32, i32
  }
}

</mosaic_0001>

<llo_original>
// kernel: tpu_custom_call.1
$region0: #{tpu_custom_call.1}
  #allocation0 [shape = 'u32[]', space=smem, size = 0x4, offset = 0x4, fixed_abs, tag = 'smem constant byte address 0x4 - core index']
  #allocation1 [shape = 'u32[144,128]{1,0:T(1,128)}', space=vmem, size = 0x12000, scoped, tag = 'internal scratch']
  %s0 = inlined_call_operand.hbm [shape: bf16[16,128], index: 0, kind: input, shape index: {}]
  %s1 = inlined_call_operand.hbm [shape: s8[128,128], index: 1, kind: input, shape index: {}]
  %s2 = inlined_call_operand.vmem [shape: f32[1,128], index: 2, kind: input, shape index: {}]
  %s3 = inlined_call_operand.vmem [shape: f32[1,128], index: 3, kind: input, shape index: {}]
  %s4 = inlined_call_operand.hbm [shape: f32[16,128], index: 4, kind: output, shape index: {}]
  %s5 = sld [smem:[#allocation0]]
  $region34: #{tpu_custom_call.1} parent=0
    _
  %s7 = ssub.s32 1, %s5
  %s8 = scalar_select 0, %s7, %s5
  $region1: #{tpu_custom_call.1} parent=0
    #allocation2 [shape = 'u8[4096]{0}', space=vmem, size = 0x1000, scoped, tag = 'input window, operand 0, single buffered']
    #allocation3 [shape = 's32[1]{0}', space=sflag, size = 0x4, scoped, tag = 'scoped memory for tpu_custom_call.1']
    #allocation4 [shape = 's32[1]{0}', space=sflag, size = 0x4, scoped, tag = 'scoped memory for tpu_custom_call.1']
    #allocation5 [shape = 'u8[16384]{0}', space=vmem, size = 0x4000, scoped, tag = 'input window, operand 1, single buffered']
    #allocation6 [shape = 's32[1]{0}', space=sflag, size = 0x4, scoped, tag = 'scoped memory for tpu_custom_call.1']
    #allocation7 [shape = 'u8[8192]{0}', space=vmem, size = 0x2000, scoped, tag = 'output window, operand 0, single buffered']
    %9 = vsyncpa [#allocation3], 0
    %10 = vsyncpa [#allocation6], 0
    %11 = vsyncpa [#allocation4], 0
    // Predicated region
    $region2: #{tpu_custom_call.1} parent=1 // pred_check
      _
    $region3: #{tpu_custom_call.1} parent=1 // pred_check_branch
      %13 = sbr.rel (0) target = $region5
    $region4: #{tpu_custom_call.1} parent=1 // pred_region
      %s15 = ssub.s32 128, 128
      %16 = vsyncadd [#allocation3], %s15
      %s17 = sshll.u32 [#allocation2], 4
      %s18 = int_to_ptr.vmem [resolvable:$true] %s17
      %23 = dma.hbm_to_vmem [thread:$0]  %s0, 128, %s18, [#allocation3], 64, 64, 4
    $region5: #{tpu_custom_call.1} parent=1 // pred_fallthru
      _
    // Predicated region
    $region6: #{tpu_custom_call.1} parent=1 // pred_check
      _
    $region7: #{tpu_custom_call.1} parent=1 // pred_check_branch
      %25 = sbr.rel (0) target = $region9
    $region8: #{tpu_custom_call.1} parent=1 // pred_region
      %s27 = ssub.s32 512, 512
      %28 = vsyncadd [#allocation6], %s27
      %s29 = sshll.u32 [#allocation5], 4
      %s30 = int_to_ptr.vmem [resolvable:$true] %s29
      %35 = dma.hbm_to_vmem [thread:$0]  %s1, 512, %s30, [#allocation6], 128, 128, 8
    $region9: #{tpu_custom_call.1} parent=1 // pred_fallthru
      _
    // Predicated region
    $region10: #{tpu_custom_call.1} parent=1 // pred_check
      _
    $region11: #{tpu_custom_call.1} parent=1 // pred_check_branch
      %37 = sbr.rel (0) target = $region13
    $region12: #{tpu_custom_call.1} parent=1 // pred_region
      _
    $region13: #{tpu_custom_call.1} parent=1 // pred_fallthru
      _
    // Predicated region
    $region14: #{tpu_custom_call.1} parent=1 // pred_check
      _
    $region15: #{tpu_custom_call.1} parent=1 // pred_check_branch
      %39 = sbr.rel (0) target = $region17
    $region16: #{tpu_custom_call.1} parent=1 // pred_region
      _
    $region17: #{tpu_custom_call.1} parent=1 // pred_fallthru
      _
    // Predicated region
    $region18: #{tpu_custom_call.1} parent=1 // pred_check
      _
    $region19: #{tpu_custom_call.1} parent=1 // pred_check_branch
      %41 = sbr.rel (0) target = $region21
    $region20: #{tpu_custom_call.1} parent=1 // pred_region
      %42 = dma.done [#allocation3], 128
    $region21: #{tpu_custom_call.1} parent=1 // pred_fallthru
      _
    // Predicated region
    $region22: #{tpu_custom_call.1} parent=1 // pred_check
      _
    $region23: #{tpu_custom_call.1} parent=1 // pred_check_branch
      %44 = sbr.rel (0) target = $region25
    $region24: #{tpu_custom_call.1} parent=1 // pred_region
      %45 = dma.done [#allocation6], 512
    $region25: #{tpu_custom_call.1} parent=1 // pred_fallthru
      _
    %v47 = vld [vmem:[#allocation2] sm:$0xf]
    %v48 = vld [vmem:[#allocation2 + $0x4] sm:$0xf]
    %v49 = vld [vmem:[#allocation5] sm:$0xff]
    %v50 = vld [vmem:[#allocation5 + $0x8] sm:$0xff]
    %v51 = vld [vmem:[#allocation5 + $0x10] sm:$0xff]
    %v52 = vld [vmem:[#allocation5 + $0x18] sm:$0xff]
    %v53 = vunpack.c.l.s8.bf16 %v49
    %v54 = vunpack.c.h.s8.bf16 %v49
    %v55 = vunpack.c.l.s8.bf16 %v50
    %v56 = vunpack.c.h.s8.bf16 %v50
    %v57 = vunpack.c.l.s8.bf16 %v51
    %v58 = vunpack.c.h.s8.bf16 %v51
    %v59 = vunpack.c.l.s8.bf16 %v52
    %v60 = vunpack.c.h.s8.bf16 %v52
    %v63 = vunpack.c.l.b16 %v47
    %v64 = vunpack.c.l.b16 %v48
    %v65 = vpack.c.b16 %v64, %v63
    %67 = vmatprep.subr.bf16.mxu0 0
    %68 = vmatpush1.bf16.msra.mxu0 %v53
    %69 = vmatprep.subr.bf16.mxu0 0
    %70 = vmatpush1.bf16.msra.mxu0 %v54
    %71 = vmatprep.subr.bf16.mxu0 0
    %72 = vmatpush1.bf16.msra.mxu0 %v55
    %73 = vmatprep.subr.bf16.mxu0 0
    %74 = vmatpush1.bf16.msra.mxu0 %v56
    %75 = vmatprep.subr.bf16.mxu0 0
    %76 = vmatpush1.bf16.msra.mxu0 %v57
    %77 = vmatprep.subr.bf16.mxu0 0
    %78 = vmatpush1.bf16.msra.mxu0 %v58
    %79 = vmatprep.subr.bf16.mxu0 0
    %80 = vmatpush1.bf16.msra.mxu0 %v59
    %81 = vmatprep.subr.bf16.mxu0 0
    %82 = vmatpush1.bf16.msra.mxu0 %v60
    %83 = vmatprep.subr.bf16.mxu0 0
    %84 = vmatpush1.bf16.msra.mxu0 0
    %85 = vmatprep.subr.bf16.mxu0 0
    %86 = vmatpush1.bf16.msra.mxu0 0
    %87 = vmatprep.subr.bf16.mxu0 0
    %88 = vmatpush1.bf16.msra.mxu0 0
    %89 = vmatprep.subr.bf16.mxu0 0
    %90 = vmatpush1.bf16.msra.mxu0 0
    %91 = vmatprep.subr.bf16.mxu0 0
    %92 = vmatpush1.bf16.msra.mxu0 0
    %93 = vmatprep.subr.bf16.mxu0 0
    %94 = vmatpush1.bf16.msra.mxu0 0
    %95 = vmatprep.subr.bf16.mxu0 0
    %96 = vmatpush1.bf16.msra.mxu0 0
    %97 = vmatprep.subr.bf16.mxu0 0
    %98 = vmatpush1.bf16.msra.mxu0 0
    %99 = vmatprep.mubr.bf16.mxu0 0
    %100 = vmatmul.mubr.bf16.gmra.mrb[0].mxu0 %v65
    %v101 = vpop.f32.mrb[0].mxu0
    %v102 = vadd.f32 0.0, %v101
    %v103 = vpop.f32.mrb[0].mxu0
    %v104 = vpop.f32.mrb[0].mxu0
    %v105 = vadd.f32 0.0, %v104
    %v106 = vpop.f32.mrb[0].mxu0
    %107 = vdwg.mxu0
    %v108 = vld [vmem:[%s2] sm:$0x1]
    %v110 = vlaneseq
    %v111 = vshrl.u32 %v110, 7
    %v112 = vsub.s32 0, %v111
    %v113 = vrot.slane %v108, %v112
    %v115 = vmul.f32 %v102, %v113
    %v116 = vmul.f32 %v105, %v113
    %v117 = vld [vmem:[%s3] sm:$0x1]
    %v119 = vlaneseq
    %v120 = vshrl.u32 %v119, 7
    %v121 = vsub.s32 0, %v120
    %v122 = vrot.slane %v117, %v121
    %v124 = vadd.f32 %v115, %v122
    %v125 = vadd.f32 %v116, %v122
    %126 = vst [vmem:[#allocation7] sm:$0xff] %v124
    %127 = vst [vmem:[#allocation7 + $0x8] sm:$0xff] %v125
    // Predicated region
    $region26: #{tpu_custom_call.1} parent=1 // pred_check
      _
    $region27: #{tpu_custom_call.1} parent=1 // pred_check_branch
      %129 = sbr.rel (0) target = $region29
    $region28: #{tpu_custom_call.1} parent=1 // pred_region
      %s131 = ssub.s32 256, 256
      %132 = vsyncadd [#allocation4], %s131
      %s133 = sshll.u32 [#allocation7], 4
      %s134 = int_to_ptr.vmem [resolvable:$true] %s133
      %139 = dma.vmem_to_hbm [thread:$0]  %s134, 256, %s4, [#allocation4], 128, 128, 8
    $region29: #{tpu_custom_call.1} parent=1 // pred_fallthru
      _
    // Predicated region
    $region30: #{tpu_custom_call.1} parent=1 // pred_check
      _
    $region31: #{tpu_custom_call.1} parent=1 // pred_check_branch
      %141 = sbr.rel (0) target = $region33
    $region32: #{tpu_custom_call.1} parent=1 // pred_region
      %142 = dma.done [#allocation4], 256
    $region33: #{tpu_custom_call.1} parent=1 // pred_fallthru
      _
    %143 = vsyncpa [#allocation3], 1
    %144 = vsyncpa [#allocation6], 1
    %145 = vsyncpa [#allocation4], 1

</llo_original>
